<compile_context>
chip_gen: v7x
topology: tpu7x:2x2x1
jax: 0.10.0
libtpu: 0.0.40
codegen_flags: <defaults>
</compile_context>

<pallas_src>
import functools

import jax
import jax.numpy as jnp
from jax import lax
from jax.experimental import pallas as pl
from jax.experimental.pallas import tpu as pltpu

EPS = 1e-5


def _stats_kernel(x_ref, stats_ref, acc_ref, *, inv_n, inv_nm1):
    # x_ref    : (C, tq) tile of (zero-padded) content, channel-major.
    # stats_ref: (2*B,) f32 in SMEM -> [mean_0, rstd_0, mean_1, rstd_1, ...]
    # acc_ref  : (2,) f32 SMEM scratch -> running [sum, sum_of_squares] for batch b.
    b = pl.program_id(0)
    t = pl.program_id(1)

    @pl.when(t == 0)
    def _():
        acc_ref[0] = jnp.float32(0.0)
        acc_ref[1] = jnp.float32(0.0)

    x = x_ref[...]                       # padded tail columns are zero -> no mask needed
    acc_ref[0] += jnp.sum(x)
    acc_ref[1] += jnp.sum(x * x)

    @pl.when(t == pl.num_programs(1) - 1)
    def _():
        s1 = acc_ref[0]
        s2 = acc_ref[1]
        mean = s1 * inv_n
        var = (s2 - s1 * mean) * inv_nm1 + EPS      # unbiased (ddof=1), matches torch .var
        stats_ref[2 * b] = mean
        stats_ref[2 * b + 1] = lax.rsqrt(var)


def _adaattn_kernel(stats_ref, ck_ref, gp_ref, bsum_ref, h_ref, x_ref, out_ref, *, nq):
    # Block shapes (batch dim squeezed by the BlockSpecs):
    #   stats_ref : (2B,)  SMEM  [mean_b, rstd_b] pairs (per-batch content stats)
    #   ck_ref    : (Ck, tq)     content_key tile, channel-major
    #   gp_ref    : (Ck, T_s)    Wf^T @ g(style_key)   (f conv folded into style side)
    #   bsum_ref  : (T_s, 1)     bf^T @ g(style_key)   (per-style-position bias row)
    #   h_ref     : (C, T_s)     h(style)
    #   x_ref     : (C, tq)      content tile, channel-major
    b = pl.program_id(0) // nq

    # Attention scores S[s, t] = sum_k gp[k, s] * ck[k, t] + bsum[s]  -> (T_s, tq)
    s = lax.dot_general(gp_ref[...], ck_ref[...], (((0,), (0,)), ((), ())),
                        preferred_element_type=jnp.float32)
    s = s + bsum_ref[...]

    # Softmax over style positions (axis 0); the 1/l normalization is folded into the
    # small (C, tq) results.  exp kept in f32 (v5e-safe, accuracy headroom).
    s_max = jnp.max(s, axis=0, keepdims=True)                      # (1, tq)
    e = jnp.exp(s - s_max)                                         # (T_s, tq) f32
    inv_l = pl.reciprocal(jnp.sum(e, axis=0, keepdims=True), approx=False)

    # Attention-weighted mean / mean-of-squares: bf16 MXU operands, f32 accumulation.
    e16 = e.astype(jnp.bfloat16)
    h = h_ref[...]                                                 # (C, T_s) f32
    h16 = h.astype(jnp.bfloat16)
    h2_16 = (h * h).astype(jnp.bfloat16)
    mean_a = jnp.dot(h16, e16, preferred_element_type=jnp.float32) * inv_l   # (C, tq)
    msq = jnp.dot(h2_16, e16, preferred_element_type=jnp.float32) * inv_l    # (C, tq)
    std_a = jnp.sqrt(jnp.maximum(msq - mean_a * mean_a, 0.0))      # relu -> sqrt

    # mean_variance_norm(content): per-batch scalars from the stats pre-pass.
    cm = stats_ref[2 * b]
    rstd = stats_ref[2 * b + 1]
    norm = (x_ref[...] - cm) * rstd                                # (C, tq)

    out_ref[...] = (std_a * norm + mean_a).astype(out_ref.dtype)


def adaattn_forward(content, style, content_key, style_key, params,
                    max_sample=256, tq=512):
    """content: (1, B, C, T_c); style: (B, C, T_s);
    content_key: (B, Ck, T_c); style_key: (B, Ck, T_s)."""
    assert content.ndim == 4 and content.shape[0] == 1
    _, B, C, T_c = content.shape
    _, Ck, T_s = style_key.shape

    # TODO(synk): the T_s > max_sample branch (torch.randperm subsampling of style
    # positions) is not implemented; inputs must keep T_s <= max_sample.
    assert T_s <= max_sample

    f32 = jnp.float32
    hi = lax.Precision.HIGHEST

    # ---- query-tile selection: lane-dense tiles; pad T_c instead of one giant tile.
    tq = max(128, (int(tq) // 128) * 128)
    tq = min(tq, ((T_c + 127) // 128) * 128)
    T_pad = ((T_c + tq - 1) // tq) * tq
    nq = T_pad // tq

    x = content.reshape(B, C, T_c).astype(f32)
    ck = content_key.astype(f32)
    if T_pad != T_c:
        pad = ((0, 0), (0, 0), (0, T_pad - T_c))
        x = jnp.pad(x, pad)     # zero padding: padded cols contribute 0 to the stats
        ck = jnp.pad(ck, pad)   # sums and are sliced off the output below

    # ---- style-side precompute (per batch, no T_c dependence; done once).
    wf = params["wf"][:, :, 0].astype(f32)
    wg = params["wg"][:, :, 0].astype(f32)
    wh = params["wh"][:, :, 0].astype(f32)
    g = (jnp.einsum("oi,bis->bos", wg, style_key.astype(f32), precision=hi)
         + params["bg"].astype(f32)[None, :, None])                      # (B, Ck, T_s)
    # Fold the f 1x1 conv: s[s,t] = sum_i gp[i,s] * ck[i,t] + bsum[s]
    gp = jnp.einsum("ko,bks->bos", wf, g, precision=hi)                  # (B, Ck, T_s)
    bsum = jnp.einsum("k,bks->bs", params["bf"].astype(f32), g,
                      precision=hi)[:, :, None]                          # (B, T_s, 1)
    h = (jnp.einsum("oi,bis->bos", wh, style.astype(f32), precision=hi)
         + params["bh"].astype(f32)[None, :, None])                      # (B, C, T_s)

    # ---- Pallas pre-pass: per-batch content mean / rsqrt(var+eps) -> flat (2B,) SMEM.
    n = C * T_c
    stats = pl.pallas_call(
        functools.partial(_stats_kernel, inv_n=1.0 / n, inv_nm1=1.0 / (n - 1)),
        out_shape=jax.ShapeDtypeStruct((2 * B,), f32),
        grid=(B, nq),
        in_specs=[pl.BlockSpec((None, C, tq), lambda b, t: (b, 0, t))],
        out_specs=pl.BlockSpec(memory_space=pltpu.MemorySpace.SMEM),
        scratch_shapes=[pltpu.SMEM((2,), f32)],
        compiler_params=pltpu.CompilerParams(
            dimension_semantics=("arbitrary", "arbitrary")),
    )(x)

    # ---- main kernel: flattened (B * nq) "parallel" grid (v7x megacore friendly).
    idx_bt = lambda i: (i // nq, 0, i % nq)
    idx_b = lambda i: (i // nq, 0, 0)
    out = pl.pallas_call(
        functools.partial(_adaattn_kernel, nq=nq),
        out_shape=jax.ShapeDtypeStruct((B, C, T_pad), f32),
        grid=(B * nq,),
        in_specs=[
            pl.BlockSpec(memory_space=pltpu.MemorySpace.SMEM),    # stats (2B,)
            pl.BlockSpec((None, Ck, tq), idx_bt),                 # content_key tile
            pl.BlockSpec((None, Ck, T_s), idx_b),                 # gp = Wf^T @ g
            pl.BlockSpec((None, T_s, 1), idx_b),                  # bsum = bf^T @ g
            pl.BlockSpec((None, C, T_s), idx_b),                  # h(style)
            pl.BlockSpec((None, C, tq), idx_bt),                  # content tile
        ],
        out_specs=pl.BlockSpec((None, C, tq), idx_bt),
        compiler_params=pltpu.CompilerParams(
            dimension_semantics=("parallel",),
            # Above the 32 MiB default scoped limit, below v7x's 64 MiB physical VMEM,
            # so realistic channel counts / larger tq still compile on every generation.
            vmem_limit_bytes=48 * 1024 * 1024),
    )(stats, ck, gp, bsum, h, x)

    out = out[:, :, :T_c]                       # drop the padded tail columns
    # (B, C, T_c) -> PyTorch output layout (1, B, C, T_c): pure reshape, no copy.
    return out.reshape(1, B, C, T_c)


def adaattn_reference(content, style, content_key, style_key, params):
    """Plain-JAX mirror of the PyTorch forward (sanity check)."""
    hi = lax.Precision.HIGHEST
    wf = params["wf"][:, :, 0]
    wg = params["wg"][:, :, 0]
    wh = params["wh"][:, :, 0]
    F = jnp.einsum("oi,bit->bot", wf, content_key, precision=hi) + params["bf"][None, :, None]
    G = jnp.einsum("oi,bit->bot", wg, style_key, precision=hi) + params["bg"][None, :, None]
    H = jnp.einsum("oi,bit->bot", wh, style, precision=hi) + params["bh"][None, :, None]

    Ft = jnp.transpose(F, (0, 2, 1))          # (B, T_c, Ck)
    Gt = jnp.transpose(G, (0, 2, 1))          # (B, T_s, Ck)
    style_flat = jnp.transpose(H, (0, 2, 1))  # (B, T_s, C)

    S = jnp.einsum("btk,bsk->bts", Ft, Gt, precision=hi)
    S = jax.nn.softmax(S, axis=-1)
    mean = jnp.einsum("bts,bsc->btc", S, style_flat, precision=hi)
    std = jnp.sqrt(jnp.maximum(
        jnp.einsum("bts,bsc->btc", S, style_flat ** 2, precision=hi) - mean ** 2, 0.0))
    mean = jnp.transpose(mean, (0, 2, 1))     # (B, C, T_c)
    std = jnp.transpose(std, (0, 2, 1))

    one, B, C, T_c = content.shape
    flat = content.reshape(one, B, -1)
    cm = flat.mean(axis=2).reshape(one, B, 1, 1)
    cv = flat.var(axis=2, ddof=1).reshape(one, B, 1, 1) + EPS
    norm = (content - cm) / jnp.sqrt(cv)
    return std * norm + mean                  # broadcast -> (1, B, C, T_c)


if __name__ == "__main__":
    B, C, Ck = 2, 8, 8          # in_planes = 8, key_planes = in_planes
    T_c, T_s = 1000, 128        # T_c not a multiple of tq -> exercises the padded tail
    max_sample = 256

    key = jax.random.PRNGKey(0)
    ks = jax.random.split(key, 10)
    params = {
        "wf": 0.2 * jax.random.normal(ks[0], (Ck, Ck, 1), jnp.float32),
        "bf": 0.1 * jax.random.normal(ks[1], (Ck,), jnp.float32),
        "wg": 0.2 * jax.random.normal(ks[2], (Ck, Ck, 1), jnp.float32),
        "bg": 0.1 * jax.random.normal(ks[3], (Ck,), jnp.float32),
        "wh": 0.2 * jax.random.normal(ks[4], (C, C, 1), jnp.float32),
        "bh": 0.1 * jax.random.normal(ks[5], (C,), jnp.float32),
    }
    content = jax.random.normal(ks[6], (1, B, C, T_c), jnp.float32)
    style = jax.random.normal(ks[7], (B, C, T_s), jnp.float32)
    content_key = jax.random.normal(ks[8], (B, Ck, T_c), jnp.float32)
    style_key = jax.random.normal(ks[9], (B, Ck, T_s), jnp.float32)

    out = adaattn_forward(content, style, content_key, style_key, params,
                          max_sample=max_sample, tq=512)
    out = jax.block_until_ready(out)

    ref = adaattn_reference(content, style, content_key, style_key, params)
    err = jnp.abs(out - ref)
    max_err = float(jnp.max(err))
    mean_err = float(jnp.mean(err))
    assert out.shape == (1, B, C, T_c)
    # bf16 MXU operands on the weighted-moment matmuls -> slightly looser max-abs
    # tolerance than a pure-f32 path; the mean error stays far below that.
    assert max_err < 5e-2, f"max abs error {max_err}"
    assert mean_err < 5e-3, f"mean abs error {mean_err}"

    print("KERNEL_OK")
</pallas_src>

<mosaic_0001>
module attributes {stable_mosaic.version = 11 : i64} {
  func.func @_stats_kernel(%arg0: i32, %arg1: i32, %arg2: memref<1x8x512xf32, #tpu.memory_space<vmem>>, %arg3: memref<4xf32, #tpu.memory_space<smem>>, %arg4: memref<2xf32, #tpu.memory_space<smem>>) attributes {dimension_semantics = [#tpu.dimension_semantics<arbitrary>, #tpu.dimension_semantics<arbitrary>], iteration_bounds = array<i64: 2, 2>, scalar_prefetch = 0 : i64, scratch_operands = 1 : i64, tpu.core_type = #tpu.core_type<tc>, window_params = [{transform_indices = @transform_0, window_bounds = array<i64: 1, 8, 512>}, {transform_indices = @transform_1, window_bounds = array<i64: 4>}]} {
    %c0_i32 = arith.constant 0 : i32
    %0 = arith.cmpi eq, %arg1, %c0_i32 : i32
    %1 = arith.extui %0 : i1 to i32
    %c0_i32_0 = arith.constant 0 : i32
    %2 = arith.cmpi ne, %1, %c0_i32_0 : i32
    scf.if %2 {
      %cst_8 = arith.constant 0.000000e+00 : f32
      %c0_9 = arith.constant 0 : index
      %23 = memref.load %arg4[%c0_9] : memref<2xf32, #tpu.memory_space<smem>>
      memref.store %cst_8, %arg4[%c0_9] : memref<2xf32, #tpu.memory_space<smem>>
      %cst_10 = arith.constant 0.000000e+00 : f32
      %c1_11 = arith.constant 1 : index
      %24 = memref.load %arg4[%c1_11] : memref<2xf32, #tpu.memory_space<smem>>
      memref.store %cst_10, %arg4[%c1_11] : memref<2xf32, #tpu.memory_space<smem>>
    } else {
    }
    %c0 = arith.constant 0 : index
    %c0_1 = arith.constant 0 : index
    %c0_2 = arith.constant 0 : index
    %3 = vector.load %arg2[%c0, %c0_1, %c0_2] : memref<1x8x512xf32, #tpu.memory_space<vmem>>, vector<1x8x512xf32>
    %4 = vector.shape_cast %3 : vector<1x8x512xf32> to vector<8x512xf32>
    %c0_3 = arith.constant 0 : index
    %5 = memref.load %arg4[%c0_3] : memref<2xf32, #tpu.memory_space<smem>>
    %6 = vector.shape_cast %4 : vector<8x512xf32> to vector<1x8x512xf32>
    %cst = arith.constant dense<0.000000e+00> : vector<1xf32>
    %7 = vector.multi_reduction <add>, %6, %cst [1, 2] : vector<1x8x512xf32> to vector<1xf32>
    %8 = vector.shape_cast %7 : vector<1xf32> to vector<1x1x1xf32>
    %9 = vector.extract %8[0, 0, 0] : f32 from vector<1x1x1xf32>
    %10 = arith.addf %5, %9 : f32
    %c0_4 = arith.constant 0 : index
    %11 = memref.load %arg4[%c0_4] : memref<2xf32, #tpu.memory_space<smem>>
    memref.store %10, %arg4[%c0_4] : memref<2xf32, #tpu.memory_space<smem>>
    %c1 = arith.constant 1 : index
    %12 = memref.load %arg4[%c1] : memref<2xf32, #tpu.memory_space<smem>>
    %13 = arith.mulf %4, %4 : vector<8x512xf32>
    %14 = vector.shape_cast %13 : vector<8x512xf32> to vector<1x8x512xf32>
    %cst_5 = arith.constant dense<0.000000e+00> : vector<1xf32>
    %15 = vector.multi_reduction <add>, %14, %cst_5 [1, 2] : vector<1x8x512xf32> to vector<1xf32>
    %16 = vector.shape_cast %15 : vector<1xf32> to vector<1x1x1xf32>
    %17 = vector.extract %16[0, 0, 0] : f32 from vector<1x1x1xf32>
    %18 = arith.addf %12, %17 : f32
    %c1_6 = arith.constant 1 : index
    %19 = memref.load %arg4[%c1_6] : memref<2xf32, #tpu.memory_space<smem>>
    memref.store %18, %arg4[%c1_6] : memref<2xf32, #tpu.memory_space<smem>>
    %c1_i32 = arith.constant 1 : i32
    %20 = arith.cmpi eq, %arg1, %c1_i32 : i32
    %21 = arith.extui %20 : i1 to i32
    %c0_i32_7 = arith.constant 0 : i32
    %22 = arith.cmpi ne, %21, %c0_i32_7 : i32
    scf.if %22 {
      %c0_8 = arith.constant 0 : index
      %23 = memref.load %arg4[%c0_8] : memref<2xf32, #tpu.memory_space<smem>>
      %c1_9 = arith.constant 1 : index
      %24 = memref.load %arg4[%c1_9] : memref<2xf32, #tpu.memory_space<smem>>
      %cst_10 = arith.constant 1.250000e-04 : f32
      %25 = arith.mulf %23, %cst_10 : f32
      %26 = arith.mulf %23, %25 : f32
      %27 = arith.subf %24, %26 : f32
      %cst_11 = arith.constant 1.2501562E-4 : f32
      %28 = arith.mulf %27, %cst_11 : f32
      %cst_12 = arith.constant 9.99999974E-6 : f32
      %29 = arith.addf %28, %cst_12 : f32
      %c2_i32 = arith.constant 2 : i32
      %30 = arith.muli %c2_i32, %arg0 : i32
      %31 = arith.index_cast %30 : i32 to index
      %32 = memref.load %arg3[%31] : memref<4xf32, #tpu.memory_space<smem>>
      memref.store %25, %arg3[%31] : memref<4xf32, #tpu.memory_space<smem>>
      %33 = math.rsqrt %29 : f32
      %c2_i32_13 = arith.constant 2 : i32
      %34 = arith.muli %c2_i32_13, %arg0 : i32
      %c1_i32_14 = arith.constant 1 : i32
      %35 = arith.addi %34, %c1_i32_14 : i32
      %36 = arith.index_cast %35 : i32 to index
      %37 = memref.load %arg3[%36] : memref<4xf32, #tpu.memory_space<smem>>
      memref.store %33, %arg3[%36] : memref<4xf32, #tpu.memory_space<smem>>
    } else {
    }
    return
  }
  func.func @transform_0(%arg0: i32, %arg1: i32) -> (i32, i32, i32) {
    %c0_i32 = arith.constant 0 : i32
    %c0_i32_0 = arith.constant 0 : i32
    return %arg0, %c0_i32, %arg1 : i32, i32, i32
  }
  func.func @transform_1(%arg0: i32, %arg1: i32) -> i32 {
    %c0_i32 = arith.constant 0 : i32
    %c0_i32_0 = arith.constant 0 : i32
    return %c0_i32 : i32
  }
}

</mosaic_0001>

<llo_original>
// kernel: tpu_custom_call.1
$region0: #{tpu_custom_call.1}
  #allocation0 [shape = 'u32[]', space=smem, size = 0x4, offset = 0x4, fixed_abs, tag = 'smem constant byte address 0x4 - core index']
  #allocation1 [shape = 'u32[144,128]{1,0:T(1,128)}', space=vmem, size = 0x12000, scoped, tag = 'internal scratch']
  #allocation2 [shape = 'f32[2]{0:T(128)}', space=smem, size = 0x200, scoped, tag = 'scratch operand']
  %s0 = inlined_call_operand.hbm [shape: f32[2,8,1024], index: 0, kind: input, shape index: {}]
  %s1 = inlined_call_operand.hbm [shape: f32[4], index: 1, kind: output, shape index: {}]
  %s2 = sld [smem:[#allocation0]]
  $region49: #{tpu_custom_call.1} parent=0
    _
  %s4 = ssub.s32 1, %s2
  %s5 = scalar_select 0, %s4, %s2
  $region1: #{tpu_custom_call.1} parent=0
    #allocation3 [shape = 'u8[32768]{0}', space=vmem, size = 0x8000, scoped, tag = 'input window, operand 0']
    #allocation4 [shape = 's32[2]{0}', space=sflag, size = 0x8, scoped, tag = 'scoped memory for tpu_custom_call.1']
    #allocation5 [shape = 's32[2]{0}', space=sflag, size = 0x8, scoped, tag = 'scoped memory for tpu_custom_call.1']
    #allocation6 [shape = 'u8[512]{0}', space=smem, size = 0x200, scoped, tag = 'output window, operand 0, single buffered']
    %6 = vsyncpa [#allocation4], 0
    %s7 = scalar_lea.sflag [#allocation4], 1
    %8 = vsyncpa %s7, 0
    %9 = vsyncpa [#allocation5], 0
    loop: start=0, step=1, limit=6
    $region2: #{tpu_custom_call.1} parent=1 // loop_pre_header
      _
    $region3: #{tpu_custom_call.1} parent=1 // loop_header
      %s11 = sphi 0, %s15
      %p12 = scmp.ge.s32.totalorder %s11, 6
      %s18 = sphi 0, %s30
      %s19 = sphi 0, %s26
      %s20 = sphi 0, %s18
      %s21 = sphi 0, %s19
      %s22 = sphi 0, %s20
      %s23 = sphi 0, %s21
      %s35 = sphi 0, %s37
      %s38 = sphi 0, %s35
      %s39 = sphi 0, %s38
      %s55 = sphi 0, %s39
      %s59 = sphi 0, %s59
      %s61 = sphi 0, %s59
      %s62 = sphi 0, %s61
      %s76 = sphi 0, %s62
    $region4: #{tpu_custom_call.1} parent=1 // loop_header_branch
      %14 = sbr.rel (%p12) target = $region8
    $region5: #{tpu_custom_call.1} parent=1 // loop_body
      %s16 = ssub.s32 %s11, 1
      %s17 = ssub.s32 %s11, 2
      %s24 = sadd.s32 1, %s19
      %p25 = scmp.ge.s32.totalorder %s24, 2
      %s26 = scalar_select %p25, 0, %s24
      %s27 = sadd.s32 1, %s18
      %s28 = scalar_select %p25, %s27, %s18
      %p29 = scmp.ge.s32.totalorder %s28, 2
      %s30 = scalar_select %p29, 0, %s28
      %s31 = ssub.s32 %s18, %s30
      %s32 = ssub.s32 %s19, %s26
      %s33 = sor.u32 %s31, %s32
      %p34 = scmp.eq.s32.totalorder %s33, 0
      %s36 = sadd.s32 %s35, 1
      %s37 = scalar_select %p34, %s35, %s36
      %p40 = pneg %p34
      %p41 = scmp.eq.s32.totalorder %s11, 3
      %p42 = por %p40, %p41
      %p43 = scmp.ne.s32.totalorder %s35, %s38
      %p44 = scmp.eq.s32.totalorder %s11, 0
      %p45 = por %p43, %p44
      %p46 = scmp.ne.s32.totalorder %s35, %s38
      %p47 = scmp.eq.s32.totalorder %s16, 3
      %p48 = por %p46, %p47
      %p49 = scmp.ne.s32.totalorder %s38, %s39
      %p50 = scmp.eq.s32.totalorder %s16, 0
      %p51 = por %p49, %p50
      %p52 = scmp.ne.s32.totalorder %s38, %s39
      %p53 = scmp.eq.s32.totalorder %s17, 3
      %p54 = por %p52, %p53
      %p56 = scmp.ne.s32.totalorder %s39, %s55
      %p57 = scmp.eq.s32.totalorder %s17, 0
      %p58 = por %p56, %p57
      %s60 = sadd.s32 %s59, 1
      %p63 = scmp.eq.s32.totalorder %s11, 3
      %p64 = scmp.ne.s32.totalorder %s59, %s61
      %p65 = scmp.eq.s32.totalorder %s11, 0
      %p66 = por %p64, %p65
      %p67 = scmp.ne.s32.totalorder %s59, %s61
      %p68 = scmp.eq.s32.totalorder %s16, 3
      %p69 = por %p67, %p68
      %p70 = scmp.ne.s32.totalorder %s61, %s62
      %p71 = scmp.eq.s32.totalorder %s16, 0
      %p72 = por %p70, %p71
      %p73 = scmp.ne.s32.totalorder %s61, %s62
      %p74 = scmp.eq.s32.totalorder %s17, 3
      %p75 = por %p73, %p74
      %p77 = scmp.ne.s32.totalorder %s62, %s76
      %p78 = scmp.eq.s32.totalorder %s17, 0
      %p79 = por %p77, %p78
      %p80 = scmp.le.s32.totalorder 1, %s11
      %p81 = scmp.lt.s32.totalorder %s11, 5
      %p82 = pnand %p80, %p81
      %p83 = pneg %p82
      // Predicated region
      $region9: #{tpu_custom_call.1} parent=5 // pred_check
        _
      $region10: #{tpu_custom_call.1} parent=5 // pred_check_branch
        %85 = sbr.rel (%p82) target = $region12
      $region11: #{tpu_custom_call.1} parent=5 // pred_region
        %s86 = ssub.s32 %s11, 1
      $region12: #{tpu_custom_call.1} parent=5 // pred_fallthru
        _
      %p87 = scmp.lt.s32.totalorder %s11, 4
      // Predicated region
      $region13: #{tpu_custom_call.1} parent=5 // pred_check
        %p88 = pneg %p87
      $region14: #{tpu_custom_call.1} parent=5 // pred_check_branch
        %90 = sbr.rel (%p88) target = $region16
      $region15: #{tpu_custom_call.1} parent=5 // pred_region
        // Predicated region
        $region17: #{tpu_custom_call.1} parent=15 // pred_check
          %p91 = pneg %p45
        $region18: #{tpu_custom_call.1} parent=15 // pred_check_branch
          %93 = sbr.rel (%p91) target = $region20
        $region19: #{tpu_custom_call.1} parent=15 // pred_region
          %s94 = sand.u32 %s35, 1
          %s95 = scalar_lea.sflag [#allocation4], %s94
          %s96 = sand.u32 %s35, 1
          %s97 = smul.addr %s96, 32
          %s98 = scalar_lea.vmem [#allocation3], %s97
          %s99 = smul.u32 4, %s19
          %s101 = ssub.s32 512, 512
          %102 = vsyncadd %s95, %s101
          %s103 = smul.addr %s18, 8
          %s104 = sadd.s32 %s99, %s103
          %s105 = smul.addr %s104, 128
          %s106 = scalar_lea.hbm %s0, %s105
          %s108 = sshll.u32 %s98, 4
          %s109 = int_to_ptr.vmem [resolvable:$true] %s108
          %111 = dma.hbm_to_vmem [thread:$0]  %s106, 512, %s109, %s95
        $region20: #{tpu_custom_call.1} parent=15 // pred_fallthru
          _
      $region16: #{tpu_custom_call.1} parent=5 // pred_fallthru
        _
      %p112 = scmp.le.s32.totalorder 1, %s11
      %p113 = scmp.lt.s32.totalorder %s11, 5
      %p114 = pnand %p112, %p113
      %p115 = pneg %p114
      // Predicated region
      $region21: #{tpu_custom_call.1} parent=5 // pred_check
        _
      $region22: #{tpu_custom_call.1} parent=5 // pred_check_branch
        %117 = sbr.rel (%p114) target = $region24
      $region23: #{tpu_custom_call.1} parent=5 // pred_region
        %s118 = ssub.s32 %s11, 1
        %s119 = sand.u32 %s38, 1
        %s120 = scalar_lea.sflag [#allocation4], %s119
        %s121 = sand.u32 %s38, 1
        %s122 = smul.addr %s121, 32
        %s123 = scalar_lea.vmem [#allocation3], %s122
        // Predicated region
        $region25: #{tpu_custom_call.1} parent=23 // pred_check
          %p124 = pneg %p51
        $region26: #{tpu_custom_call.1} parent=23 // pred_check_branch
          %126 = sbr.rel (%p124) target = $region28
        $region27: #{tpu_custom_call.1} parent=23 // pred_region
          %127 = dma.done %s120, 512
        $region28: #{tpu_custom_call.1} parent=23 // pred_fallthru
          _
        %s128 = sand.u32 %s38, 1
        %s129 = scalar_lea.sflag [#allocation4], %s128
        %s130 = sand.u32 %s38, 1
        %s131 = smul.addr %s130, 32
        %s132 = scalar_lea.vmem [#allocation3], %s131
        %p133 = pneg %p51
        %p134 = pneg %p48
        %p135 = pneg %p72
        %p136 = pneg %p69
        %s137 = smul.u32 4, %s21
        %p138 = scmp.eq.s32.totalorder %s21, 0
        // Predicated region
        $region29: #{tpu_custom_call.1} parent=23 // pred_check
          %p139 = pneg %p138
        $region30: #{tpu_custom_call.1} parent=23 // pred_check_branch
          %141 = sbr.rel (%p139) target = $region32
        $region31: #{tpu_custom_call.1} parent=23 // pred_region
          %s142 = scalar_lea.smem [#allocation2], 0
          %143 = sst [smem:[%s142]] 0.0
          %s144 = scalar_lea.smem [#allocation2], 1
          %145 = sst [smem:[%s144]] 0.0
        $region32: #{tpu_custom_call.1} parent=23 // pred_fallthru
          _
        %v146 = vld [vmem:[%s123] sm:$0xff]
        %v147 = vld [vmem:[%s123 + $0x8] sm:$0xff]
        %v148 = vld [vmem:[%s123 + $0x10] sm:$0xff]
        %v149 = vld [vmem:[%s123 + $0x18] sm:$0xff]
        %s150 = sld [smem:[#allocation2]]
        %v151 = vadd.f32 %v146, %v147
        %v152 = vadd.f32 %v151, %v148
        %v153 = vadd.f32 %v152, %v149
        %154 = vadd.xlane.f32.xlu0 %v153
        %v155 = vpop.xlane.xlu0 %154
        %v156 = vrot.slane %v155, 4
        %v157 = vadd.f32 %v155, %v156
        %v158 = vrot.slane %v157, 2
        %v159 = vadd.f32 %v157, %v158
        %v160 = vrot.slane %v159, 1
        %v161 = vadd.f32 %v159, %v160
        %s162 = vtos %v161
        %s163 = sadd.f32 %s150, %s162
        %s164 = scalar_lea.smem [#allocation2], 0
        %165 = sst [smem:[%s164]] %s163
        %s166 = sld [smem:[#allocation2 + $0x1]]
        %v167 = vmul.f32 %v146, %v146
        %v168 = vmul.f32 %v147, %v147
        %v169 = vmul.f32 %v148, %v148
        %v170 = vmul.f32 %v149, %v149
        %v171 = vadd.f32 %v167, %v168
        %v172 = vadd.f32 %v171, %v169
        %v173 = vadd.f32 %v172, %v170
        %174 = vadd.xlane.f32.xlu0 %v173
        %v175 = vpop.xlane.xlu0 %174
        %v176 = vrot.slane %v175, 4
        %v177 = vadd.f32 %v175, %v176
        %v178 = vrot.slane %v177, 2
        %v179 = vadd.f32 %v177, %v178
        %v180 = vrot.slane %v179, 1
        %v181 = vadd.f32 %v179, %v180
        %s182 = vtos %v181
        %s183 = sadd.f32 %s166, %s182
        %s184 = scalar_lea.smem [#allocation2], 1
        %185 = sst [smem:[%s184]] %s183
        %p186 = scmp.eq.s32.totalorder %s21, 1
        // Predicated region
        $region33: #{tpu_custom_call.1} parent=23 // pred_check
          %p187 = pneg %p186
        $region34: #{tpu_custom_call.1} parent=23 // pred_check_branch
          %189 = sbr.rel (%p187) target = $region36
        $region35: #{tpu_custom_call.1} parent=23 // pred_region
          %s190 = sld [smem:[#allocation2]]
          %s191 = sld [smem:[#allocation2 + $0x1]]
          %s192 = smul.f32 %s190, 0.000125
          %s193 = smul.f32 %s190, %s192
          %s194 = ssub.f32 %s191, %s193
          %s195 = smul.f32 %s194, 0.00012501562
          %s196 = sadd.f32 %s195, 1e-05
          %s197 = smul.u32 %s20, 2
          %s198 = scalar_lea.smem [#allocation6], %s197
          %199 = sst [smem:[%s198]] %s192
          %v200 = vstv %s196
          %v201 = vrsqrt.pop %v200
          %s202 = vtos %v201
          %s203 = sadd.s32 %s197, 1
          %s204 = scalar_lea.smem [#allocation6], %s203
          %205 = sst [smem:[%s204]] %s202
        $region36: #{tpu_custom_call.1} parent=23 // pred_fallthru
          _
        // Predicated region
        $region37: #{tpu_custom_call.1} parent=23 // pred_check
          %p206 = pneg %p69
        $region38: #{tpu_custom_call.1} parent=23 // pred_check_branch
          %208 = sbr.rel (%p206) target = $region40
        $region39: #{tpu_custom_call.1} parent=23 // pred_region
          %s210 = ssub.s32 16, 16
          %211 = vsyncadd [#allocation5], %s210
          %214 = dma.smem_to_hbm [#allocation6], 16, %s1, [#allocation5]
        $region40: #{tpu_custom_call.1} parent=23 // pred_fallthru
          _
        // Predicated region
        $region41: #{tpu_custom_call.1} parent=23 // pred_check
          %p215 = pneg %p69
        $region42: #{tpu_custom_call.1} parent=23 // pred_check_branch
          %217 = sbr.rel (%p215) target = $region44
        $region43: #{tpu_custom_call.1} parent=23 // pred_region
          %218 = dma.done [#allocation5], 16
        $region44: #{tpu_custom_call.1} parent=23 // pred_fallthru
          _
        %219 = sfence
      $region24: #{tpu_custom_call.1} parent=5 // pred_fallthru
        _
      %p220 = scmp.le.s32.totalorder 2, %s11
      // Predicated region
      $region45: #{tpu_custom_call.1} parent=5 // pred_check
        %p221 = pneg %p220
      $region46: #{tpu_custom_call.1} parent=5 // pred_check_branch
        %223 = sbr.rel (%p221) target = $region48
      $region47: #{tpu_custom_call.1} parent=5 // pred_region
        %s224 = ssub.s32 %s11, 2
      $region48: #{tpu_custom_call.1} parent=5 // pred_fallthru
        _
    $region6: #{tpu_custom_call.1} parent=1 // loop_footer
      %s15 = sadd.s32 1, %s11
    $region7: #{tpu_custom_call.1} parent=1 // loop_footer_branch
      %10 = sbr.rel target = $region3
    $region8: #{tpu_custom_call.1} parent=1 // loop_exit
      _
    %225 = vsyncpa [#allocation4], 1
    %s226 = scalar_lea.sflag [#allocation4], 1
    %227 = vsyncpa %s226, 1
    %228 = vsyncpa [#allocation5], 1
    %s229 = scalar_lea.sflag [#allocation5], 1
    %230 = vsyncpa %s229, 1

</llo_original>
